<compile_context>
chip_gen: v6e
topology: v6e:2x2x1
jax: 0.10.0
libtpu: 0.0.40
codegen_flags: <defaults>
</compile_context>

<pallas_src>
import jax
import jax.numpy as jnp
from jax.experimental import pallas as pl
from jax.experimental.pallas import tpu as pltpu


def _style_emb_kernel(idx_ref, table_ref, o_ref):
    """Embedding gather for one batch tile via one-hot matmul.

    idx_ref:   (tb, 1)      int32    indices for this batch tile (VMEM)
    table_ref: (N, E_pad)   float32  full embedding table, resident in VMEM
    o_ref:     (tb, E_pad)  float32  gathered embedding rows
    """
    ids = idx_ref[...]                                           # (tb, 1)
    tb = o_ref.shape[0]
    n_emb = table_ref.shape[0]
    iota = jax.lax.broadcasted_iota(jnp.int32, (tb, n_emb), 1)   # (tb, N)
    onehot = (iota == ids).astype(table_ref.dtype)               # exact 0/1 rows
    o_ref[...] = jnp.dot(
        onehot, table_ref[...],
        preferred_element_type=jnp.float32).astype(o_ref.dtype)


def style_emb_forward(hyperparameters, emb_weight, *, tb=256):
    """JAX/Pallas equivalent of StyleEmbEncoder.forward.

    hyperparameters: (B, 1) integer indices (torch LongTensor analogue)
    emb_weight:      (num_embeddings, em_size) float32 embedding table
    returns:         (B, em_size) float32
    """
    B = hyperparameters.shape[0]
    idx = hyperparameters.reshape(B).astype(jnp.int32)           # .squeeze(1)
    n_emb, em_size = emb_weight.shape

    table = emb_weight.astype(jnp.float32)

    # Pad the embedding dim to a lane multiple (128) so output stores are
    # unmasked, full-lane vst's.  The pad columns are sliced off afterwards.
    e_pad = ((em_size + 127) // 128) * 128
    if e_pad != em_size:
        table = jnp.pad(table, ((0, 0), (0, e_pad - em_size)))

    # Row tile: big enough to amortize per-step overhead, never bigger than
    # the (8-aligned) padded batch.  Pad B to a multiple of the tile instead
    # of requiring divisibility; padding rows gather row 0 and are dropped.
    tb = min(tb, max(8, ((B + 7) // 8) * 8))
    padded_b = ((B + tb - 1) // tb) * tb
    idx_p = jnp.zeros((padded_b, 1), jnp.int32).at[:B, 0].set(idx)

    out = pl.pallas_call(
        _style_emb_kernel,
        out_shape=jax.ShapeDtypeStruct((padded_b, e_pad), jnp.float32),
        grid=(padded_b // tb,),
        in_specs=[
            # per-tile indices
            pl.BlockSpec((tb, 1), lambda i: (i, 0)),
            # whole embedding table, constant block index -> resident in VMEM
            pl.BlockSpec((n_emb, e_pad), lambda i: (0, 0)),
        ],
        out_specs=pl.BlockSpec((tb, e_pad), lambda i: (i, 0)),
        compiler_params=pltpu.CompilerParams(
            dimension_semantics=("parallel",)),
    )(idx_p, table)

    return out[:B, :em_size]


class StyleEmbEncoder:
    """Mirror of the PyTorch module's constructor + forward."""

    def __init__(self, num_hyperparameters, em_size, num_embeddings=100, *, key):
        assert num_hyperparameters == 1
        self.em_size = em_size
        # nn.Embedding default init ~ N(0, 1)
        self.embedding = jax.random.normal(
            key, (num_embeddings, em_size), dtype=jnp.float32)

    def __call__(self, hyperparameters):
        return style_emb_forward(hyperparameters, self.embedding)


def _reference(hyperparameters, emb_weight):
    """Pure-JAX transliteration of the PyTorch forward, for verification."""
    idx = hyperparameters.reshape(hyperparameters.shape[0])
    return emb_weight[idx]


if __name__ == "__main__":
    B = 8
    num_hyperparameters = 1
    em_size = 32
    num_embeddings = 100

    key = jax.random.PRNGKey(0)
    k_emb, k_idx = jax.random.split(key)

    enc = StyleEmbEncoder(num_hyperparameters, em_size, num_embeddings, key=k_emb)
    hyperparameters = jax.random.randint(
        k_idx, (B, num_hyperparameters), 0, num_embeddings, dtype=jnp.int32)

    out = enc(hyperparameters)
    out = jax.block_until_ready(out)

    ref = _reference(hyperparameters, enc.embedding)
    assert out.shape == (B, em_size), out.shape
    assert jnp.allclose(out, ref, atol=1e-6, rtol=1e-6)

    print("KERNEL_OK")
</pallas_src>

<mosaic_0001>
module attributes {stable_mosaic.version = 11 : i64} {
  func.func @_style_emb_kernel(%arg0: i32, %arg1: memref<8x1xi32, #tpu.memory_space<vmem>>, %arg2: memref<100x128xf32, #tpu.memory_space<vmem>>, %arg3: memref<8x128xf32, #tpu.memory_space<vmem>>) attributes {dimension_semantics = [#tpu.dimension_semantics<parallel>], iteration_bounds = array<i64: 1>, scalar_prefetch = 0 : i64, scratch_operands = 0 : i64, tpu.core_type = #tpu.core_type<tc>, window_params = [{transform_indices = @transform_0, window_bounds = array<i64: 8, 1>}, {pipeline_mode = #tpu.pipeline_mode<synchronous>, transform_indices = @transform_1, window_bounds = array<i64: 100, 128>}, {transform_indices = @transform_2, window_bounds = array<i64: 8, 128>}]} {
    %c0 = arith.constant 0 : index
    %c0_0 = arith.constant 0 : index
    %0 = vector.load %arg1[%c0, %c0_0] : memref<8x1xi32, #tpu.memory_space<vmem>>, vector<8x1xi32>
    %1 = tpu.iota {dimensions = array<i32: 1>} : vector<8x100xi32>
    %2 = vector.broadcast %0 : vector<8x1xi32> to vector<8x100xi32>
    %3 = arith.cmpi eq, %1, %2 : vector<8x100xi32>
    %4 = arith.extui %3 : vector<8x100xi1> to vector<8x100xi32>
    %5 = arith.sitofp %4 : vector<8x100xi32> to vector<8x100xf32>
    %c0_1 = arith.constant 0 : index
    %c0_2 = arith.constant 0 : index
    %6 = vector.load %arg2[%c0_1, %c0_2] : memref<100x128xf32, #tpu.memory_space<vmem>>, vector<100x128xf32>
    %cst = arith.constant dense<0.000000e+00> : vector<8x128xf32>
    %7 = tpu.matmul %5, %6, %cst {dimension_numbers = #tpu.dot_dimension_numbers<[1], [0], [0], [1], [0, 0, 1, 1], [], []>} : vector<8x100xf32>, vector<100x128xf32>, vector<8x128xf32> -> vector<8x128xf32>
    %c0_3 = arith.constant 0 : index
    %c0_4 = arith.constant 0 : index
    %8 = vector.load %arg3[%c0_3, %c0_4] : memref<8x128xf32, #tpu.memory_space<vmem>>, vector<8x128xf32>
    tpu.vector_store %arg3[%c0_3, %c0_4], %7 {strides = array<i32>} : memref<8x128xf32, #tpu.memory_space<vmem>>, vector<8x128xf32>,
    return
  }
  func.func @transform_0(%arg0: i32) -> (i32, i32) {
    %c0_i32 = arith.constant 0 : i32
    %c0_i32_0 = arith.constant 0 : i32
    return %arg0, %c0_i32 : i32, i32
  }
  func.func @transform_1(%arg0: i32) -> (i32, i32) {
    %c0_i32 = arith.constant 0 : i32
    %c0_i32_0 = arith.constant 0 : i32
    %c0_i32_1 = arith.constant 0 : i32
    return %c0_i32, %c0_i32_0 : i32, i32
  }
  func.func @transform_2(%arg0: i32) -> (i32, i32) {
    %c0_i32 = arith.constant 0 : i32
    %c0_i32_0 = arith.constant 0 : i32
    return %arg0, %c0_i32 : i32, i32
  }
}

</mosaic_0001>

<llo_original>
// kernel: tpu_custom_call.1
$region0: #{tpu_custom_call.1}
  #allocation0 [shape = 'u32[]', space=smem, size = 0x4, offset = 0x4, fixed_abs, tag = 'smem constant byte address 0x4 - core index']
  #allocation1 [shape = 'u32[144,128]{1,0:T(1,128)}', space=vmem, size = 0x12000, scoped, tag = 'internal scratch']
  %s0 = inlined_call_operand.vmem [shape: s32[8,1], index: 0, kind: input, shape index: {}]
  %s1 = inlined_call_operand.hbm [shape: f32[100,128], index: 1, kind: input, shape index: {}]
  %s2 = inlined_call_operand.hbm [shape: f32[8,128], index: 2, kind: output, shape index: {}]
  %s3 = sld [smem:[#allocation0]]
  $region22: #{tpu_custom_call.1} parent=0
    _
  %s5 = ssub.s32 1, %s3
  %s6 = scalar_select 0, %s5, %s3
  $region1: #{tpu_custom_call.1} parent=0
    #allocation2 [shape = 'u8[53248]{0}', space=vmem, size = 0xd000, scoped, tag = 'input window, operand 1, single buffered']
    #allocation3 [shape = 's32[1]{0}', space=sflag, size = 0x4, scoped, tag = 'scoped memory for tpu_custom_call.1']
    #allocation4 [shape = 's32[1]{0}', space=sflag, size = 0x4, scoped, tag = 'scoped memory for tpu_custom_call.1']
    #allocation5 [shape = 'u8[4096]{0}', space=vmem, size = 0x1000, scoped, tag = 'output window, operand 0, single buffered']
    %7 = vsyncpa [#allocation3], 0
    %8 = vsyncpa [#allocation4], 0
    // Predicated region
    $region2: #{tpu_custom_call.1} parent=1 // pred_check
      _
    $region3: #{tpu_custom_call.1} parent=1 // pred_check_branch
      %10 = sbr.rel (0) target = $region5
    $region4: #{tpu_custom_call.1} parent=1 // pred_region
      _
    $region5: #{tpu_custom_call.1} parent=1 // pred_fallthru
      _
    // Predicated region
    $region6: #{tpu_custom_call.1} parent=1 // pred_check
      _
    $region7: #{tpu_custom_call.1} parent=1 // pred_check_branch
      %12 = sbr.rel (0) target = $region9
    $region8: #{tpu_custom_call.1} parent=1 // pred_region
      %s14 = ssub.s32 1664, 1664
      %15 = vsyncadd [#allocation3], %s14
      %s16 = sshll.u32 [#allocation2], 4
      %s17 = int_to_ptr.vmem [resolvable:$true] %s16
      %22 = dma.hbm_to_vmem [thread:$0]  %s1, 1664, %s17, [#allocation3], 128, 128, 8
    $region9: #{tpu_custom_call.1} parent=1 // pred_fallthru
      _
    // Predicated region
    $region10: #{tpu_custom_call.1} parent=1 // pred_check
      _
    $region11: #{tpu_custom_call.1} parent=1 // pred_check_branch
      %24 = sbr.rel (0) target = $region13
    $region12: #{tpu_custom_call.1} parent=1 // pred_region
      %25 = dma.done [#allocation3], 1664
    $region13: #{tpu_custom_call.1} parent=1 // pred_fallthru
      _
    %v26 = vld [vmem:[%s0] sm:$0xff]
    %v27 = vlaneseq
    %v28 = vand.u32 %v27, 127
    %29 = vset.pattern.permute.xlu0 0
    %30 = vperm.xlu0 %29, %v26
    %v31 = vpop.permute.xlu0 %30
    %vm32 = vcmp.eq.s32.totalorder %v28, %v31
    %v33 = vsel %vm32, 1, 0
    %v34 = vcvt.s32.f32 %v33
    %v35 = vld [vmem:[#allocation2] sm:$0xff]
    %v36 = vld [vmem:[#allocation2 + $0x8] sm:$0xff]
    %v37 = vld [vmem:[#allocation2 + $0x10] sm:$0xff]
    %v38 = vld [vmem:[#allocation2 + $0x18] sm:$0xff]
    %v39 = vld [vmem:[#allocation2 + $0x20] sm:$0xff]
    %v40 = vld [vmem:[#allocation2 + $0x28] sm:$0xff]
    %v41 = vld [vmem:[#allocation2 + $0x30] sm:$0xff]
    %v42 = vld [vmem:[#allocation2 + $0x38] sm:$0xff]
    %v43 = vld [vmem:[#allocation2 + $0x40] sm:$0xff]
    %v44 = vld [vmem:[#allocation2 + $0x48] sm:$0xff]
    %v45 = vld [vmem:[#allocation2 + $0x50] sm:$0xff]
    %v46 = vld [vmem:[#allocation2 + $0x58] sm:$0xff]
    %v47 = vld [vmem:[#allocation2 + $0x60] sm:$0xf]
    %vm48 = vcmask 818176
    %v50 = vsel %vm48, %v34, 0
    %vm52 = vcmask 1043456
    %v54 = vsel %vm52, %v47, 0
    %56 = vmatprep.subr.mxu0 0.0
    %57 = vmatpush1.msra.mxu0 0.0
    %58 = vmatprep.subr.mxu0 0.0
    %59 = vmatpush1.msra.mxu0 0.0
    %60 = vmatprep.subr.mxu0 0.0
    %61 = vmatpush1.msra.mxu0 0.0
    %62 = vmatprep.subr.mxu0 0.0
    %63 = vmatpush1.msra.mxu0 %v54
    %64 = vmatprep.subr.mxu0 0.0
    %65 = vmatpush1.msra.mxu0 %v46
    %66 = vmatprep.subr.mxu0 0.0
    %67 = vmatpush1.msra.mxu0 %v45
    %68 = vmatprep.subr.mxu0 0.0
    %69 = vmatpush1.msra.mxu0 %v44
    %70 = vmatprep.subr.mxu0 0.0
    %71 = vmatpush1.msra.mxu0 %v43
    %72 = vmatprep.subr.mxu0 0.0
    %73 = vmatpush1.msra.mxu0 %v42
    %74 = vmatprep.subr.mxu0 0.0
    %75 = vmatpush1.msra.mxu0 %v41
    %76 = vmatprep.subr.mxu0 0.0
    %77 = vmatpush1.msra.mxu0 %v40
    %78 = vmatprep.subr.mxu0 0.0
    %79 = vmatpush1.msra.mxu0 %v39
    %80 = vmatprep.subr.mxu0 0.0
    %81 = vmatpush1.msra.mxu0 %v38
    %82 = vmatprep.subr.mxu0 0.0
    %83 = vmatpush1.msra.mxu0 %v37
    %84 = vmatprep.subr.mxu0 0.0
    %85 = vmatpush1.msra.mxu0 %v36
    %86 = vmatprep.subr.mxu0 0.0
    %87 = vmatpush1.msra.mxu0 %v35
    %88 = vmatprep.subr.mxu0 0.0
    %89 = vmatpush2.msra.mxu0 0.0
    %90 = vmatprep.subr.mxu0 0.0
    %91 = vmatpush2.msra.mxu0 0.0
    %92 = vmatprep.subr.mxu0 0.0
    %93 = vmatpush2.msra.mxu0 0.0
    %94 = vmatprep.subr.mxu0 0.0
    %95 = vmatpush2.msra.mxu0 0.0
    %96 = vmatprep.subr.mxu0 0.0
    %97 = vmatpush2.msra.mxu0 0.0
    %98 = vmatprep.subr.mxu0 0.0
    %99 = vmatpush2.msra.mxu0 0.0
    %100 = vmatprep.subr.mxu0 0.0
    %101 = vmatpush2.msra.mxu0 0.0
    %102 = vmatprep.subr.mxu0 0.0
    %103 = vmatpush2.msra.mxu0 0.0
    %104 = vmatprep.subr.mxu0 0.0
    %105 = vmatpush2.msra.mxu0 0.0
    %106 = vmatprep.subr.mxu0 0.0
    %107 = vmatpush2.msra.mxu0 0.0
    %108 = vmatprep.subr.mxu0 0.0
    %109 = vmatpush2.msra.mxu0 0.0
    %110 = vmatprep.subr.mxu0 0.0
    %111 = vmatpush2.msra.mxu0 0.0
    %112 = vmatprep.subr.mxu0 0.0
    %113 = vmatpush2.msra.mxu0 0.0
    %114 = vmatprep.subr.mxu0 0.0
    %115 = vmatpush2.msra.mxu0 0.0
    %116 = vmatprep.subr.mxu0 0.0
    %117 = vmatpush2.msra.mxu0 0.0
    %118 = vmatprep.subr.mxu0 0.0
    %119 = vmatpush2.msra.mxu0 0.0
    %120 = vmatprep.mubr.f32.mxu0 0.0
    %121 = vmatmul.mubr.f32.gmra.mxu0 %v50
    %v122 = vpop.f32.mrf.mxu0
    %v123 = vadd.f32 0.0, %v122
    %v124 = vpop.f32.mrf.mxu0
    %125 = vdwg.mxu0
    %126 = vst [vmem:[#allocation5] sm:$0xff] %v123
    // Predicated region
    $region14: #{tpu_custom_call.1} parent=1 // pred_check
      _
    $region15: #{tpu_custom_call.1} parent=1 // pred_check_branch
      %128 = sbr.rel (0) target = $region17
    $region16: #{tpu_custom_call.1} parent=1 // pred_region
      %s130 = ssub.s32 128, 128
      %131 = vsyncadd [#allocation4], %s130
      %s133 = sshll.u32 [#allocation5], 4
      %s134 = int_to_ptr.vmem [resolvable:$true] %s133
      %136 = dma.vmem_to_hbm [thread:$0]  %s134, 128, %s2, [#allocation4]
    $region17: #{tpu_custom_call.1} parent=1 // pred_fallthru
      _
    // Predicated region
    $region18: #{tpu_custom_call.1} parent=1 // pred_check
      _
    $region19: #{tpu_custom_call.1} parent=1 // pred_check_branch
      %138 = sbr.rel (0) target = $region21
    $region20: #{tpu_custom_call.1} parent=1 // pred_region
      %139 = dma.done [#allocation4], 128
    $region21: #{tpu_custom_call.1} parent=1 // pred_fallthru
      _
    %140 = vsyncpa [#allocation3], 1
    %141 = vsyncpa [#allocation4], 1

</llo_original>
